<compile_context>
chip_gen: v5e
topology: v5e:2x2
jax: 0.10.0
libtpu: 0.0.40
codegen_flags: <defaults>
</compile_context>

<pallas_src>
import jax
import jax.numpy as jnp
from jax.experimental import pallas as pl
from jax.experimental.pallas import tpu as pltpu


def _round_up(n, m):
    return ((n + m - 1) // m) * m


def encoder_kernel(x_ref, w1_ref, b1_ref, w2_ref, b2_ref, w3_ref, b3_ref, o_ref):
    # x_ref: [TB, 512] f32 streamed from HBM; bf16 cast happens here on the VPU
    # (hidden under the input DMA) right before the first MXU matmul.
    x = x_ref[...].astype(jnp.bfloat16)
    h1 = jnp.dot(x, w1_ref[...], preferred_element_type=jnp.float32) + b1_ref[...]
    h1 = jnp.maximum(h1, 0.0).astype(jnp.bfloat16)
    h2 = jnp.dot(h1, w2_ref[...], preferred_element_type=jnp.float32) + b2_ref[...]
    h2 = jnp.maximum(h2, 0.0).astype(jnp.bfloat16)
    h3 = jnp.dot(h2, w3_ref[...], preferred_element_type=jnp.float32) + b3_ref[...]
    o_ref[...] = h3.astype(o_ref.dtype)  # lane-dense [TB, 128] store (no vst.msk)


def encoder_forward(x, params, *, encoded_dim=34, tb=2048,
                    out_dtype=jnp.bfloat16, return_padded=False):
    """x: [B, input_dim] float32 (cast to bf16 inside the kernel).
    params: dict of [in, out] bf16 weights (w3 zero-padded to 128 cols) + f32 biases.
    tb: batch rows per grid step. 2048 is a good default on v6e/v7x; use <=1024
        on v5e (smaller scoped-VMEM default).  If return_padded, the raw
        lane-padded [B, 128] block is returned so a consumer can fuse the slice."""
    B, D = x.shape
    out_pad = params["w3"].shape[1]          # lane-aligned (128), padded from encoded_dim
    out_bytes = jnp.dtype(out_dtype).itemsize

    # Batch tile: multiple of 8 sublanes, no bigger than the (sublane-padded) batch.
    tb_eff = max(8, min(tb, _round_up(B, 8)))
    # v7x megacore: keep >=2 grid steps when the batch allows it so
    # dimension_semantics=("parallel",) actually engages both TensorCores.
    if B >= 16 and pl.cdiv(B, tb_eff) < 2:
        tb_eff = _round_up(pl.cdiv(B, 2), 8)
    grid = (pl.cdiv(B, tb_eff),)             # remainder tile handled by masked writeback

    const2d = lambda i: (0, 0)               # weights/biases stay VMEM-resident

    w_bytes = sum(int(params[k].size) * params[k].dtype.itemsize
                  for k in ("w1", "w2", "w3"))
    b_bytes = sum(int(params[k].size) * params[k].dtype.itemsize
                  for k in ("b1", "b2", "b3"))

    flops = 2 * B * (D * 256 + 256 * 128 + 128 * out_pad)
    bytes_accessed = (B * D * 4                       # x (f32, read once)
                      + B * out_pad * out_bytes       # out
                      + w_bytes + b_bytes)            # resident params

    # Per-step VMEM footprint: double-buffered x/out blocks, double-buffered
    # (tiny) params, plus in-kernel f32/bf16 intermediates.  Give 1.5x headroom.
    vmem_est = (2 * tb_eff * D * 4
                + 2 * tb_eff * out_pad * out_bytes
                + 2 * (w_bytes + b_bytes)
                + tb_eff * (256 * 4 + 256 * 2 + 128 * 4 + 128 * 2 + out_pad * 4))
    vmem_limit = min(max(int(vmem_est * 1.5), 32 << 20), 100 << 20)

    out = pl.pallas_call(
        encoder_kernel,
        out_shape=jax.ShapeDtypeStruct((B, out_pad), out_dtype),
        grid=grid,
        in_specs=[
            pl.BlockSpec((tb_eff, D), lambda i: (i, 0)),
            pl.BlockSpec(params["w1"].shape, const2d),
            pl.BlockSpec(params["b1"].shape, const2d),
            pl.BlockSpec(params["w2"].shape, const2d),
            pl.BlockSpec(params["b2"].shape, const2d),
            pl.BlockSpec(params["w3"].shape, const2d),
            pl.BlockSpec(params["b3"].shape, const2d),
        ],
        out_specs=pl.BlockSpec((tb_eff, out_pad), lambda i: (i, 0)),
        compiler_params=pltpu.CompilerParams(
            dimension_semantics=("parallel",),
            vmem_limit_bytes=vmem_limit),
        cost_estimate=pl.CostEstimate(
            flops=flops, bytes_accessed=bytes_accessed, transcendentals=0),
    )(
        x,
        params["w1"], params["b1"],
        params["w2"], params["b2"],
        params["w3"], params["b3"],
    )
    if return_padded:
        return out                      # consumer can fuse the [:, :encoded_dim] slice
    return out[:, :encoded_dim]


def init_params(key, input_dim=512, encoded_dim=34):
    """Deterministic init mimicking nn.Linear default (uniform +- 1/sqrt(fan_in)).
    Weights stored as [in, out] bf16 (transposed from PyTorch's [out, in]);
    the last layer is zero-padded along out to a multiple of 128 lanes."""
    dims = [(input_dim, 256), (256, 128), (128, encoded_dim)]
    params = {}
    for i, (fan_in, fan_out) in enumerate(dims, start=1):
        key, kw, kb = jax.random.split(key, 3)
        bound = 1.0 / (fan_in ** 0.5)
        w = jax.random.uniform(kw, (fan_in, fan_out), jnp.float32,
                               minval=-bound, maxval=bound)
        b = jax.random.uniform(kb, (1, fan_out), jnp.float32,
                               minval=-bound, maxval=bound)
        pad = _round_up(fan_out, 128) - fan_out
        if pad:
            w = jnp.pad(w, ((0, 0), (0, pad)))
            b = jnp.pad(b, ((0, 0), (0, pad)))
        params[f"w{i}"] = w.astype(jnp.bfloat16)
        params[f"b{i}"] = b  # biases stay f32 (tiny; added post-accumulation)
    return params


def encoder_reference(x, params, encoded_dim=34, out_dtype=jnp.bfloat16):
    """Pure-JAX reference with the same bf16 quantization as the kernel."""
    def f32(a):
        return a.astype(jnp.float32)
    xq = f32(x.astype(jnp.bfloat16))
    h1 = jnp.maximum(xq @ f32(params["w1"]) + params["b1"], 0.0)
    h1 = f32(h1.astype(jnp.bfloat16))
    h2 = jnp.maximum(h1 @ f32(params["w2"]) + params["b2"], 0.0)
    h2 = f32(h2.astype(jnp.bfloat16))
    h3 = (h2 @ f32(params["w3"]) + params["b3"]).astype(out_dtype)
    return f32(h3)[:, :encoded_dim]


if __name__ == "__main__":
    key = jax.random.PRNGKey(0)
    k_param, k_x = jax.random.split(key)

    input_dim, encoded_dim = 512, 34
    batch = 20  # not a multiple of the tile -> exercises the remainder grid step

    params = init_params(k_param, input_dim=input_dim, encoded_dim=encoded_dim)
    x = jax.random.normal(k_x, (batch, input_dim), dtype=jnp.float32)

    # tb=8 here so the small demo runs a multi-step pipelined grid with a
    # masked remainder tile; for real workloads use the default tb=2048
    # (<=1024 on v5e) and sweep.
    out = encoder_forward(x, params, encoded_dim=encoded_dim, tb=8)
    out = jax.block_until_ready(out)

    ref = encoder_reference(x, params, encoded_dim=encoded_dim)
    assert out.shape == (batch, encoded_dim), out.shape
    # Final store is bf16 (per perf review), so tolerance reflects bf16 ulp.
    assert jnp.allclose(out.astype(jnp.float32), ref, atol=2e-2, rtol=2e-2), \
        "mismatch vs reference"

    print("KERNEL_OK")
</pallas_src>

<mosaic_0001>
module attributes {stable_mosaic.version = 11 : i64} {
  func.func @encoder_kernel(%arg0: i32, %arg1: memref<8x512xf32, #tpu.memory_space<vmem>>, %arg2: memref<512x256xbf16, #tpu.memory_space<vmem>>, %arg3: memref<1x256xf32, #tpu.memory_space<vmem>>, %arg4: memref<256x128xbf16, #tpu.memory_space<vmem>>, %arg5: memref<1x128xf32, #tpu.memory_space<vmem>>, %arg6: memref<128x128xbf16, #tpu.memory_space<vmem>>, %arg7: memref<1x128xf32, #tpu.memory_space<vmem>>, %arg8: memref<8x128xbf16, #tpu.memory_space<vmem>>) attributes {dimension_semantics = [#tpu.dimension_semantics<parallel>], iteration_bounds = array<i64: 3>, scalar_prefetch = 0 : i64, scratch_operands = 0 : i64, tpu.core_type = #tpu.core_type<tc>, window_params = [{transform_indices = @transform_0, window_bounds = array<i64: 8, 512>}, {pipeline_mode = #tpu.pipeline_mode<synchronous>, transform_indices = @transform_1, window_bounds = array<i64: 512, 256>}, {pipeline_mode = #tpu.pipeline_mode<synchronous>, transform_indices = @transform_2, window_bounds = array<i64: 1, 256>}, {pipeline_mode = #tpu.pipeline_mode<synchronous>, transform_indices = @transform_3, window_bounds = array<i64: 256, 128>}, {pipeline_mode = #tpu.pipeline_mode<synchronous>, transform_indices = @transform_4, window_bounds = array<i64: 1, 128>}, {pipeline_mode = #tpu.pipeline_mode<synchronous>, transform_indices = @transform_5, window_bounds = array<i64: 128, 128>}, {pipeline_mode = #tpu.pipeline_mode<synchronous>, transform_indices = @transform_6, window_bounds = array<i64: 1, 128>}, {transform_indices = @transform_7, window_bounds = array<i64: 8, 128>}]} {
    %c0 = arith.constant 0 : index
    %c0_0 = arith.constant 0 : index
    %0 = vector.load %arg1[%c0, %c0_0] : memref<8x512xf32, #tpu.memory_space<vmem>>, vector<8x512xf32>
    %1 = arith.truncf %0 : vector<8x512xf32> to vector<8x512xbf16>
    %c0_1 = arith.constant 0 : index
    %c0_2 = arith.constant 0 : index
    %2 = vector.load %arg2[%c0_1, %c0_2] : memref<512x256xbf16, #tpu.memory_space<vmem>>, vector<512x256xbf16>
    %cst = arith.constant dense<0.000000e+00> : vector<8x256xf32>
    %3 = tpu.matmul %1, %2, %cst {dimension_numbers = #tpu.dot_dimension_numbers<[1], [0], [0], [1], [0, 0, 1, 1], [], []>} : vector<8x512xbf16>, vector<512x256xbf16>, vector<8x256xf32> -> vector<8x256xf32>
    %c0_3 = arith.constant 0 : index
    %c0_4 = arith.constant 0 : index
    %4 = vector.load %arg3[%c0_3, %c0_4] : memref<1x256xf32, #tpu.memory_space<vmem>>, vector<1x256xf32>
    %5 = vector.broadcast %4 : vector<1x256xf32> to vector<8x256xf32>
    %6 = arith.addf %3, %5 : vector<8x256xf32>
    %cst_5 = arith.constant 0.000000e+00 : f32
    %7 = vector.broadcast %cst_5 : f32 to vector<8x256xf32>
    %8 = arith.maximumf %6, %7 : vector<8x256xf32>
    %9 = arith.truncf %8 : vector<8x256xf32> to vector<8x256xbf16>
    %c0_6 = arith.constant 0 : index
    %c0_7 = arith.constant 0 : index
    %10 = vector.load %arg4[%c0_6, %c0_7] : memref<256x128xbf16, #tpu.memory_space<vmem>>, vector<256x128xbf16>
    %cst_8 = arith.constant dense<0.000000e+00> : vector<8x128xf32>
    %11 = tpu.matmul %9, %10, %cst_8 {dimension_numbers = #tpu.dot_dimension_numbers<[1], [0], [0], [1], [0, 0, 1, 1], [], []>} : vector<8x256xbf16>, vector<256x128xbf16>, vector<8x128xf32> -> vector<8x128xf32>
    %c0_9 = arith.constant 0 : index
    %c0_10 = arith.constant 0 : index
    %12 = vector.load %arg5[%c0_9, %c0_10] : memref<1x128xf32, #tpu.memory_space<vmem>>, vector<1x128xf32>
    %13 = vector.broadcast %12 : vector<1x128xf32> to vector<8x128xf32>
    %14 = arith.addf %11, %13 : vector<8x128xf32>
    %cst_11 = arith.constant 0.000000e+00 : f32
    %15 = vector.broadcast %cst_11 : f32 to vector<8x128xf32>
    %16 = arith.maximumf %14, %15 : vector<8x128xf32>
    %17 = arith.truncf %16 : vector<8x128xf32> to vector<8x128xbf16>
    %c0_12 = arith.constant 0 : index
    %c0_13 = arith.constant 0 : index
    %18 = vector.load %arg6[%c0_12, %c0_13] : memref<128x128xbf16, #tpu.memory_space<vmem>>, vector<128x128xbf16>
    %cst_14 = arith.constant dense<0.000000e+00> : vector<8x128xf32>
    %19 = tpu.matmul %17, %18, %cst_14 {dimension_numbers = #tpu.dot_dimension_numbers<[1], [0], [0], [1], [0, 0, 1, 1], [], []>} : vector<8x128xbf16>, vector<128x128xbf16>, vector<8x128xf32> -> vector<8x128xf32>
    %c0_15 = arith.constant 0 : index
    %c0_16 = arith.constant 0 : index
    %20 = vector.load %arg7[%c0_15, %c0_16] : memref<1x128xf32, #tpu.memory_space<vmem>>, vector<1x128xf32>
    %21 = vector.broadcast %20 : vector<1x128xf32> to vector<8x128xf32>
    %22 = arith.addf %19, %21 : vector<8x128xf32>
    %23 = arith.truncf %22 : vector<8x128xf32> to vector<8x128xbf16>
    %c0_17 = arith.constant 0 : index
    %c0_18 = arith.constant 0 : index
    %24 = vector.load %arg8[%c0_17, %c0_18] : memref<8x128xbf16, #tpu.memory_space<vmem>>, vector<8x128xbf16>
    tpu.vector_store %arg8[%c0_17, %c0_18], %23 {strides = array<i32>} : memref<8x128xbf16, #tpu.memory_space<vmem>>, vector<8x128xbf16>,
    return
  }
  func.func @transform_0(%arg0: i32) -> (i32, i32) {
    %c0_i32 = arith.constant 0 : i32
    %c0_i32_0 = arith.constant 0 : i32
    return %arg0, %c0_i32 : i32, i32
  }
  func.func @transform_1(%arg0: i32) -> (i32, i32) {
    %c0_i32 = arith.constant 0 : i32
    %c0_i32_0 = arith.constant 0 : i32
    %c0_i32_1 = arith.constant 0 : i32
    return %c0_i32, %c0_i32_0 : i32, i32
  }
  func.func @transform_2(%arg0: i32) -> (i32, i32) {
    %c0_i32 = arith.constant 0 : i32
    %c0_i32_0 = arith.constant 0 : i32
    %c0_i32_1 = arith.constant 0 : i32
    return %c0_i32, %c0_i32_0 : i32, i32
  }
  func.func @transform_3(%arg0: i32) -> (i32, i32) {
    %c0_i32 = arith.constant 0 : i32
    %c0_i32_0 = arith.constant 0 : i32
    %c0_i32_1 = arith.constant 0 : i32
    return %c0_i32, %c0_i32_0 : i32, i32
  }
  func.func @transform_4(%arg0: i32) -> (i32, i32) {
    %c0_i32 = arith.constant 0 : i32
    %c0_i32_0 = arith.constant 0 : i32
    %c0_i32_1 = arith.constant 0 : i32
    return %c0_i32, %c0_i32_0 : i32, i32
  }
  func.func @transform_5(%arg0: i32) -> (i32, i32) {
    %c0_i32 = arith.constant 0 : i32
    %c0_i32_0 = arith.constant 0 : i32
    %c0_i32_1 = arith.constant 0 : i32
    return %c0_i32, %c0_i32_0 : i32, i32
  }
  func.func @transform_6(%arg0: i32) -> (i32, i32) {
    %c0_i32 = arith.constant 0 : i32
    %c0_i32_0 = arith.constant 0 : i32
    %c0_i32_1 = arith.constant 0 : i32
    return %c0_i32, %c0_i32_0 : i32, i32
  }
  func.func @transform_7(%arg0: i32) -> (i32, i32) {
    %c0_i32 = arith.constant 0 : i32
    %c0_i32_0 = arith.constant 0 : i32
    return %arg0, %c0_i32 : i32, i32
  }
}

</mosaic_0001>

<llo_original>
// kernel: tpu_custom_call.1
$region0: #{tpu_custom_call.1}
  #allocation0 [shape = 'u32[]', space=smem, size = 0x4, offset = 0x4, fixed_abs, tag = 'smem constant byte address 0x4 - core index']
  #allocation1 [shape = 'u32[72,128]{1,0:T(1,128)}', space=vmem, size = 0x9000, scoped, tag = 'internal scratch']
  %s0 = inlined_call_operand.hbm [shape: f32[20,512], index: 0, kind: input, shape index: {}]
  %s1 = inlined_call_operand.hbm [shape: bf16[512,256], index: 1, kind: input, shape index: {}]
  %s2 = inlined_call_operand.hbm [shape: f32[1,256], index: 2, kind: input, shape index: {}]
  %s3 = inlined_call_operand.hbm [shape: bf16[256,128], index: 3, kind: input, shape index: {}]
  %s4 = inlined_call_operand.vmem [shape: f32[1,128], index: 4, kind: input, shape index: {}]
  %s5 = inlined_call_operand.hbm [shape: bf16[128,128], index: 5, kind: input, shape index: {}]
  %s6 = inlined_call_operand.vmem [shape: f32[1,128], index: 6, kind: input, shape index: {}]
  %s7 = inlined_call_operand.hbm [shape: bf16[20,128], index: 7, kind: output, shape index: {}]
  %s8 = sld [smem:[#allocation0]]
  $region81: #{tpu_custom_call.1} parent=0
    _
  %s10 = ssub.s32 1, %s8
  %s11 = scalar_select 0, %s10, %s8
  $region1: #{tpu_custom_call.1} parent=0
    #allocation2 [shape = 'u8[32768]{0}', space=vmem, size = 0x8000, scoped, tag = 'input window, operand 0']
    #allocation3 [shape = 's32[2]{0}', space=sflag, size = 0x8, scoped, tag = 'scoped memory for tpu_custom_call.1']
    #allocation4 [shape = 's32[2]{0}', space=sflag, size = 0x8, scoped, tag = 'scoped memory for tpu_custom_call.1']
    #allocation5 [shape = 'u8[262144]{0}', space=vmem, size = 0x40000, scoped, tag = 'input window, operand 1, single buffered']
    #allocation6 [shape = 's32[1]{0}', space=sflag, size = 0x4, scoped, tag = 'scoped memory for tpu_custom_call.1']
    #allocation7 [shape = 'u8[1024]{0}', space=vmem, size = 0x400, scoped, tag = 'input window, operand 2, single buffered']
    #allocation8 [shape = 'u8[65536]{0}', space=vmem, size = 0x10000, scoped, tag = 'input window, operand 3, single buffered']
    #allocation9 [shape = 's32[1]{0}', space=sflag, size = 0x4, scoped, tag = 'scoped memory for tpu_custom_call.1']
    #allocation10 [shape = 'u8[32768]{0}', space=vmem, size = 0x8000, scoped, tag = 'input window, operand 5, single buffered']
    #allocation11 [shape = 'u8[4096]{0}', space=vmem, size = 0x1000, scoped, tag = 'output window, operand 0']
    %12 = vsyncpa [#allocation3], 0
    %s13 = scalar_lea.sflag [#allocation3], 1
    %14 = vsyncpa %s13, 0
    %15 = vsyncpa [#allocation6], 0
    %16 = vsyncpa [#allocation9], 0
    %17 = vsyncpa [#allocation4], 0
    %s18 = scalar_lea.sflag [#allocation4], 1
    %19 = vsyncpa %s18, 0
    loop: start=0, step=1, limit=5
    $region2: #{tpu_custom_call.1} parent=1 // loop_pre_header
      _
    $region3: #{tpu_custom_call.1} parent=1 // loop_header
      %s21 = sphi 0, %s25
      %p22 = scmp.ge.s32.totalorder %s21, 5
      %s31 = sphi 0, %s33
      %s34 = sphi 0, %s31
      %s35 = sphi 0, %s34
      %s51 = sphi 0, %s35
      %s55 = sphi 0, %s55
      %s57 = sphi 0, %s55
      %s58 = sphi 0, %s57
      %s72 = sphi 0, %s58
      %s76 = sphi 0, %s76
      %s78 = sphi 0, %s76
      %s79 = sphi 0, %s78
      %s93 = sphi 0, %s79
      %s97 = sphi 0, %s97
      %s99 = sphi 0, %s97
      %s100 = sphi 0, %s99
      %s114 = sphi 0, %s100
      %s118 = sphi 0, %s118
      %s120 = sphi 0, %s118
      %s121 = sphi 0, %s120
      %s135 = sphi 0, %s121
      %s139 = sphi 0, %s139
      %s141 = sphi 0, %s139
      %s142 = sphi 0, %s141
      %s156 = sphi 0, %s142
      %s160 = sphi 0, %s160
      %s162 = sphi 0, %s160
      %s163 = sphi 0, %s162
      %s177 = sphi 0, %s163
      %s183 = sphi 0, %s185
      %s186 = sphi 0, %s183
      %s187 = sphi 0, %s186
      %s203 = sphi 0, %s187
    $region4: #{tpu_custom_call.1} parent=1 // loop_header_branch
      %24 = sbr.rel (%p22) target = $region8
    $region5: #{tpu_custom_call.1} parent=1 // loop_body
      %s26 = ssub.s32 %s21, 1
      %s27 = ssub.s32 %s21, 2
      %s28 = sadd.s32 %s21, 1
      %s29 = ssub.s32 %s21, %s28
      %p30 = scmp.eq.s32.totalorder %s29, 0
      %s32 = sadd.s32 %s31, 1
      %s33 = scalar_select %p30, %s31, %s32
      %p36 = pneg %p30
      %p37 = scmp.eq.s32.totalorder %s21, 2
      %p38 = por %p36, %p37
      %p39 = scmp.ne.s32.totalorder %s31, %s34
      %p40 = scmp.eq.s32.totalorder %s21, 0
      %p41 = por %p39, %p40
      %p42 = scmp.ne.s32.totalorder %s31, %s34
      %p43 = scmp.eq.s32.totalorder %s26, 2
      %p44 = por %p42, %p43
      %p45 = scmp.ne.s32.totalorder %s34, %s35
      %p46 = scmp.eq.s32.totalorder %s26, 0
      %p47 = por %p45, %p46
      %p48 = scmp.ne.s32.totalorder %s34, %s35
      %p49 = scmp.eq.s32.totalorder %s27, 2
      %p50 = por %p48, %p49
      %p52 = scmp.ne.s32.totalorder %s35, %s51
      %p53 = scmp.eq.s32.totalorder %s27, 0
      %p54 = por %p52, %p53
      %s56 = sadd.s32 %s55, 1
      %p59 = scmp.eq.s32.totalorder %s21, 2
      %p60 = scmp.ne.s32.totalorder %s55, %s57
      %p61 = scmp.eq.s32.totalorder %s21, 0
      %p62 = por %p60, %p61
      %p63 = scmp.ne.s32.totalorder %s55, %s57
      %p64 = scmp.eq.s32.totalorder %s26, 2
      %p65 = por %p63, %p64
      %p66 = scmp.ne.s32.totalorder %s57, %s58
      %p67 = scmp.eq.s32.totalorder %s26, 0
      %p68 = por %p66, %p67
      %p69 = scmp.ne.s32.totalorder %s57, %s58
      %p70 = scmp.eq.s32.totalorder %s27, 2
      %p71 = por %p69, %p70
      %p73 = scmp.ne.s32.totalorder %s58, %s72
      %p74 = scmp.eq.s32.totalorder %s27, 0
      %p75 = por %p73, %p74
      %s77 = sadd.s32 %s76, 1
      %p80 = scmp.eq.s32.totalorder %s21, 2
      %p81 = scmp.ne.s32.totalorder %s76, %s78
      %p82 = scmp.eq.s32.totalorder %s21, 0
      %p83 = por %p81, %p82
      %p84 = scmp.ne.s32.totalorder %s76, %s78
      %p85 = scmp.eq.s32.totalorder %s26, 2
      %p86 = por %p84, %p85
      %p87 = scmp.ne.s32.totalorder %s78, %s79
      %p88 = scmp.eq.s32.totalorder %s26, 0
      %p89 = por %p87, %p88
      %p90 = scmp.ne.s32.totalorder %s78, %s79
      %p91 = scmp.eq.s32.totalorder %s27, 2
      %p92 = por %p90, %p91
      %p94 = scmp.ne.s32.totalorder %s79, %s93
      %p95 = scmp.eq.s32.totalorder %s27, 0
      %p96 = por %p94, %p95
      %s98 = sadd.s32 %s97, 1
      %p101 = scmp.eq.s32.totalorder %s21, 2
      %p102 = scmp.ne.s32.totalorder %s97, %s99
      %p103 = scmp.eq.s32.totalorder %s21, 0
      %p104 = por %p102, %p103
      %p105 = scmp.ne.s32.totalorder %s97, %s99
      %p106 = scmp.eq.s32.totalorder %s26, 2
      %p107 = por %p105, %p106
      %p108 = scmp.ne.s32.totalorder %s99, %s100
      %p109 = scmp.eq.s32.totalorder %s26, 0
      %p110 = por %p108, %p109
      %p111 = scmp.ne.s32.totalorder %s99, %s100
      %p112 = scmp.eq.s32.totalorder %s27, 2
      %p113 = por %p111, %p112
      %p115 = scmp.ne.s32.totalorder %s100, %s114
      %p116 = scmp.eq.s32.totalorder %s27, 0
      %p117 = por %p115, %p116
      %s119 = sadd.s32 %s118, 1
      %p122 = scmp.eq.s32.totalorder %s21, 2
      %p123 = scmp.ne.s32.totalorder %s118, %s120
      %p124 = scmp.eq.s32.totalorder %s21, 0
      %p125 = por %p123, %p124
      %p126 = scmp.ne.s32.totalorder %s118, %s120
      %p127 = scmp.eq.s32.totalorder %s26, 2
      %p128 = por %p126, %p127
      %p129 = scmp.ne.s32.totalorder %s120, %s121
      %p130 = scmp.eq.s32.totalorder %s26, 0
      %p131 = por %p129, %p130
      %p132 = scmp.ne.s32.totalorder %s120, %s121
      %p133 = scmp.eq.s32.totalorder %s27, 2
      %p134 = por %p132, %p133
      %p136 = scmp.ne.s32.totalorder %s121, %s135
      %p137 = scmp.eq.s32.totalorder %s27, 0
      %p138 = por %p136, %p137
      %s140 = sadd.s32 %s139, 1
      %p143 = scmp.eq.s32.totalorder %s21, 2
      %p144 = scmp.ne.s32.totalorder %s139, %s141
      %p145 = scmp.eq.s32.totalorder %s21, 0
      %p146 = por %p144, %p145
      %p147 = scmp.ne.s32.totalorder %s139, %s141
      %p148 = scmp.eq.s32.totalorder %s26, 2
      %p149 = por %p147, %p148
      %p150 = scmp.ne.s32.totalorder %s141, %s142
      %p151 = scmp.eq.s32.totalorder %s26, 0
      %p152 = por %p150, %p151
      %p153 = scmp.ne.s32.totalorder %s141, %s142
      %p154 = scmp.eq.s32.totalorder %s27, 2
      %p155 = por %p153, %p154
      %p157 = scmp.ne.s32.totalorder %s142, %s156
      %p158 = scmp.eq.s32.totalorder %s27, 0
      %p159 = por %p157, %p158
      %s161 = sadd.s32 %s160, 1
      %p164 = scmp.eq.s32.totalorder %s21, 2
      %p165 = scmp.ne.s32.totalorder %s160, %s162
      %p166 = scmp.eq.s32.totalorder %s21, 0
      %p167 = por %p165, %p166
      %p168 = scmp.ne.s32.totalorder %s160, %s162
      %p169 = scmp.eq.s32.totalorder %s26, 2
      %p170 = por %p168, %p169
      %p171 = scmp.ne.s32.totalorder %s162, %s163
      %p172 = scmp.eq.s32.totalorder %s26, 0
      %p173 = por %p171, %p172
      %p174 = scmp.ne.s32.totalorder %s162, %s163
      %p175 = scmp.eq.s32.totalorder %s27, 2
      %p176 = por %p174, %p175
      %p178 = scmp.ne.s32.totalorder %s163, %s177
      %p179 = scmp.eq.s32.totalorder %s27, 0
      %p180 = por %p178, %p179
      %s181 = ssub.s32 %s21, %s28
      %p182 = scmp.eq.s32.totalorder %s181, 0
      %s184 = sadd.s32 %s183, 1
      %s185 = scalar_select %p182, %s183, %s184
      %p188 = pneg %p182
      %p189 = scmp.eq.s32.totalorder %s21, 2
      %p190 = por %p188, %p189
      %p191 = scmp.ne.s32.totalorder %s183, %s186
      %p192 = scmp.eq.s32.totalorder %s21, 0
      %p193 = por %p191, %p192
      %p194 = scmp.ne.s32.totalorder %s183, %s186
      %p195 = scmp.eq.s32.totalorder %s26, 2
      %p196 = por %p194, %p195
      %p197 = scmp.ne.s32.totalorder %s186, %s187
      %p198 = scmp.eq.s32.totalorder %s26, 0
      %p199 = por %p197, %p198
      %p200 = scmp.ne.s32.totalorder %s186, %s187
      %p201 = scmp.eq.s32.totalorder %s27, 2
      %p202 = por %p200, %p201
      %p204 = scmp.ne.s32.totalorder %s187, %s203
      %p205 = scmp.eq.s32.totalorder %s27, 0
      %p206 = por %p204, %p205
      %p207 = scmp.le.s32.totalorder 1, %s21
      %p208 = scmp.lt.s32.totalorder %s21, 4
      %p209 = pnand %p207, %p208
      %p210 = pneg %p209
      // Predicated region
      $region9: #{tpu_custom_call.1} parent=5 // pred_check
        _
      $region10: #{tpu_custom_call.1} parent=5 // pred_check_branch
        %212 = sbr.rel (%p209) target = $region12
      $region11: #{tpu_custom_call.1} parent=5 // pred_region
        %s213 = ssub.s32 %s21, 1
        // Predicated region
        $region13: #{tpu_custom_call.1} parent=11 // pred_check
          %p214 = pneg %p68
        $region14: #{tpu_custom_call.1} parent=11 // pred_check_branch
          %216 = sbr.rel (%p214) target = $region16
        $region15: #{tpu_custom_call.1} parent=11 // pred_region
          %218 = vsyncadd [#allocation6], 0
          %s219 = sshll.u32 %s1, 4
          %s220 = int_to_ptr.hbm [resolvable:$true] %s219
          %s221 = sshll.u32 [#allocation5], 4
          %s222 = int_to_ptr.vmem [resolvable:$true] %s221
          %227 = dma.hbm_to_vmem [thread:$0]  %s220, 8192, %s222, [#allocation6], 128, 128, 8
        $region16: #{tpu_custom_call.1} parent=11 // pred_fallthru
          _
        // Predicated region
        $region17: #{tpu_custom_call.1} parent=11 // pred_check
          %p228 = pneg %p89
        $region18: #{tpu_custom_call.1} parent=11 // pred_check_branch
          %230 = sbr.rel (%p228) target = $region20
        $region19: #{tpu_custom_call.1} parent=11 // pred_region
          %232 = vsyncadd [#allocation6], 0
          %s234 = sshll.u32 %s2, 4
          %s235 = int_to_ptr.hbm [resolvable:$true] %s234
          %s236 = sshll.u32 [#allocation7], 4
          %s237 = int_to_ptr.vmem [resolvable:$true] %s236
          %239 = dma.hbm_to_vmem [thread:$0]  %s235, 32, %s237, [#allocation6]
        $region20: #{tpu_custom_call.1} parent=11 // pred_fallthru
          _
        // Predicated region
        $region21: #{tpu_custom_call.1} parent=11 // pred_check
          %p240 = pneg %p110
        $region22: #{tpu_custom_call.1} parent=11 // pred_check_branch
          %242 = sbr.rel (%p240) target = $region24
        $region23: #{tpu_custom_call.1} parent=11 // pred_region
          %244 = vsyncadd [#allocation9], 0
          %s245 = sshll.u32 %s3, 4
          %s246 = int_to_ptr.hbm [resolvable:$true] %s245
          %s247 = sshll.u32 [#allocation8], 4
          %s248 = int_to_ptr.vmem [resolvable:$true] %s247
          %253 = dma.hbm_to_vmem [thread:$0]  %s246, 2048, %s248, [#allocation9], 64, 64, 4
        $region24: #{tpu_custom_call.1} parent=11 // pred_fallthru
          _
        // Predicated region
        $region25: #{tpu_custom_call.1} parent=11 // pred_check
          %p254 = pneg %p131
        $region26: #{tpu_custom_call.1} parent=11 // pred_check_branch
          %256 = sbr.rel (%p254) target = $region28
        $region27: #{tpu_custom_call.1} parent=11 // pred_region
          _
        $region28: #{tpu_custom_call.1} parent=11 // pred_fallthru
          _
        // Predicated region
        $region29: #{tpu_custom_call.1} parent=11 // pred_check
          %p257 = pneg %p152
        $region30: #{tpu_custom_call.1} parent=11 // pred_check_branch
          %259 = sbr.rel (%p257) target = $region32
        $region31: #{tpu_custom_call.1} parent=11 // pred_region
          %261 = vsyncadd [#allocation9], 0
          %s262 = sshll.u32 %s5, 4
          %s263 = int_to_ptr.hbm [resolvable:$true] %s262
          %s264 = sshll.u32 [#allocation10], 4
          %s265 = int_to_ptr.vmem [resolvable:$true] %s264
          %270 = dma.hbm_to_vmem [thread:$0]  %s263, 1024, %s265, [#allocation9], 64, 64, 4
        $region32: #{tpu_custom_call.1} parent=11 // pred_fallthru
          _
        // Predicated region
        $region33: #{tpu_custom_call.1} parent=11 // pred_check
          %p271 = pneg %p173
        $region34: #{tpu_custom_call.1} parent=11 // pred_check_branch
          %273 = sbr.rel (%p271) target = $region36
        $region35: #{tpu_custom_call.1} parent=11 // pred_region
          _
        $region36: #{tpu_custom_call.1} parent=11 // pred_fallthru
          _
      $region12: #{tpu_custom_call.1} parent=5 // pred_fallthru
        _
      %p274 = scmp.lt.s32.totalorder %s21, 3
      // Predicated region
      $region37: #{tpu_custom_call.1} parent=5 // pred_check
        %p275 = pneg %p274
      $region38: #{tpu_custom_call.1} parent=5 // pred_check_branch
        %277 = sbr.rel (%p275) target = $region40
      $region39: #{tpu_custom_call.1} parent=5 // pred_region
        // Predicated region
        $region41: #{tpu_custom_call.1} parent=39 // pred_check
          %p278 = pneg %p41
        $region42: #{tpu_custom_call.1} parent=39 // pred_check_branch
          %280 = sbr.rel (%p278) target = $region44
        $region43: #{tpu_custom_call.1} parent=39 // pred_region
          %s281 = sand.u32 %s31, 1
          %s282 = scalar_lea.sflag [#allocation3], %s281
          %s283 = sand.u32 %s31, 1
          %s284 = smul.addr %s283, 32
          %s285 = scalar_lea.vmem [#allocation2], %s284
          %287 = vsyncadd %s282, 0
          %s288 = smul.addr %s21, 4
          %s289 = smul.addr %s288, 8
          %s290 = scalar_lea.hbm %s0, %s289
          %s292 = sshll.u32 %s290, 4
          %s293 = int_to_ptr.hbm [resolvable:$true] %s292
          %s294 = sshll.u32 %s285, 4
          %s295 = int_to_ptr.vmem [resolvable:$true] %s294
          %297 = dma.hbm_to_vmem [thread:$0]  %s293, 512, %s295, %s282
        $region44: #{tpu_custom_call.1} parent=39 // pred_fallthru
          _
      $region40: #{tpu_custom_call.1} parent=5 // pred_fallthru
        _
      %p298 = scmp.le.s32.totalorder 1, %s21
      %p299 = scmp.lt.s32.totalorder %s21, 4
      %p300 = pnand %p298, %p299
      %p301 = pneg %p300
      // Predicated region
      $region45: #{tpu_custom_call.1} parent=5 // pred_check
        _
      $region46: #{tpu_custom_call.1} parent=5 // pred_check_branch
        %303 = sbr.rel (%p300) target = $region48
      $region47: #{tpu_custom_call.1} parent=5 // pred_region
        %s304 = ssub.s32 %s21, 1
        %s305 = sand.u32 %s34, 1
        %s306 = scalar_lea.sflag [#allocation3], %s305
        %s307 = sand.u32 %s34, 1
        %s308 = smul.addr %s307, 32
        %s309 = scalar_lea.vmem [#allocation2], %s308
        // Predicated region
        $region49: #{tpu_custom_call.1} parent=47 // pred_check
          %p310 = pneg %p47
        $region50: #{tpu_custom_call.1} parent=47 // pred_check_branch
          %312 = sbr.rel (%p310) target = $region52
        $region51: #{tpu_custom_call.1} parent=47 // pred_region
          %314 = dma.done %s306, 512
        $region52: #{tpu_custom_call.1} parent=47 // pred_fallthru
          _
        // Predicated region
        $region53: #{tpu_custom_call.1} parent=47 // pred_check
          %p315 = pneg %p68
        $region54: #{tpu_custom_call.1} parent=47 // pred_check_branch
          %317 = sbr.rel (%p315) target = $region56
        $region55: #{tpu_custom_call.1} parent=47 // pred_region
          %319 = dma.done [#allocation6], 8192
        $region56: #{tpu_custom_call.1} parent=47 // pred_fallthru
          _
        // Predicated region
        $region57: #{tpu_custom_call.1} parent=47 // pred_check
          %p320 = pneg %p89
        $region58: #{tpu_custom_call.1} parent=47 // pred_check_branch
          %322 = sbr.rel (%p320) target = $region60
        $region59: #{tpu_custom_call.1} parent=47 // pred_region
          %324 = dma.done [#allocation6], 32
        $region60: #{tpu_custom_call.1} parent=47 // pred_fallthru
          _
        // Predicated region
        $region61: #{tpu_custom_call.1} parent=47 // pred_check
          %p325 = pneg %p110
        $region62: #{tpu_custom_call.1} parent=47 // pred_check_branch
          %327 = sbr.rel (%p325) target = $region64
        $region63: #{tpu_custom_call.1} parent=47 // pred_region
          %329 = dma.done [#allocation9], 2048
        $region64: #{tpu_custom_call.1} parent=47 // pred_fallthru
          _
        // Predicated region
        $region65: #{tpu_custom_call.1} parent=47 // pred_check
          %p330 = pneg %p152
        $region66: #{tpu_custom_call.1} parent=47 // pred_check_branch
          %332 = sbr.rel (%p330) target = $region68
        $region67: #{tpu_custom_call.1} parent=47 // pred_region
          %334 = dma.done [#allocation9], 1024
        $region68: #{tpu_custom_call.1} parent=47 // pred_fallthru
          _
        %s335 = sand.u32 %s34, 1
        %s336 = scalar_lea.sflag [#allocation3], %s335
        %s337 = sand.u32 %s34, 1
        %s338 = smul.addr %s337, 32
        %s339 = scalar_lea.vmem [#allocation2], %s338
        %p340 = pneg %p47
        %p341 = pneg %p44
        %p342 = pneg %p68
        %p343 = pneg %p65
        %p344 = pneg %p89
        %p345 = pneg %p86
        %p346 = pneg %p110
        %p347 = pneg %p107
        %p348 = pneg %p131
        %p349 = pneg %p128
        %p350 = pneg %p152
        %p351 = pneg %p149
        %p352 = pneg %p173
        %p353 = pneg %p170
        %p354 = pneg %p199
        %p355 = pneg %p196
        %s356 = sand.u32 %s186, 1
        %s357 = scalar_lea.sflag [#allocation4], %s356
        %s358 = sand.u32 %s186, 1
        %s359 = smul.addr %s358, 4
        %s360 = scalar_lea.vmem [#allocation11], %s359
        %v361 = vld [vmem:[%s309] sm:$0xff]
        %v362 = vld [vmem:[%s309 + $0x8] sm:$0xff]
        %v363 = vld [vmem:[%s309 + $0x10] sm:$0xff]
        %v364 = vld [vmem:[%s309 + $0x18] sm:$0xff]
        %v365 = vpack.c.bf16 %v361, %v361
        %v366 = vpack.c.bf16 %v362, %v362
        %v367 = vpack.c.bf16 %v363, %v363
        %v368 = vpack.c.bf16 %v364, %v364
        %v369 = vld [vmem:[#allocation5] sm:$0xff]
        %v370 = vld [vmem:[#allocation5 + $0x8] sm:$0xff]
        %v371 = vld [vmem:[#allocation5 + $0x10] sm:$0xff]
        %v372 = vld [vmem:[#allocation5 + $0x18] sm:$0xff]
        %v373 = vld [vmem:[#allocation5 + $0x20] sm:$0xff]
        %v374 = vld [vmem:[#allocation5 + $0x28] sm:$0xff]
        %v375 = vld [vmem:[#allocation5 + $0x30] sm:$0xff]
        %v376 = vld [vmem:[#allocation5 + $0x38] sm:$0xff]
        %v377 = vld [vmem:[#allocation5 + $0x40] sm:$0xff]
        %v378 = vld [vmem:[#allocation5 + $0x48] sm:$0xff]
        %v379 = vld [vmem:[#allocation5 + $0x50] sm:$0xff]
        %v380 = vld [vmem:[#allocation5 + $0x58] sm:$0xff]
        %v381 = vld [vmem:[#allocation5 + $0x60] sm:$0xff]
        %v382 = vld [vmem:[#allocation5 + $0x68] sm:$0xff]
        %v383 = vld [vmem:[#allocation5 + $0x70] sm:$0xff]
        %v384 = vld [vmem:[#allocation5 + $0x78] sm:$0xff]
        %v385 = vld [vmem:[#allocation5 + $0x80] sm:$0xff]
        %v386 = vld [vmem:[#allocation5 + $0x88] sm:$0xff]
        %v387 = vld [vmem:[#allocation5 + $0x90] sm:$0xff]
        %v388 = vld [vmem:[#allocation5 + $0x98] sm:$0xff]
        %v389 = vld [vmem:[#allocation5 + $0xa0] sm:$0xff]
        %v390 = vld [vmem:[#allocation5 + $0xa8] sm:$0xff]
        %v391 = vld [vmem:[#allocation5 + $0xb0] sm:$0xff]
        %v392 = vld [vmem:[#allocation5 + $0xb8] sm:$0xff]
        %v393 = vld [vmem:[#allocation5 + $0xc0] sm:$0xff]
        %v394 = vld [vmem:[#allocation5 + $0xc8] sm:$0xff]
        %v395 = vld [vmem:[#allocation5 + $0xd0] sm:$0xff]
        %v396 = vld [vmem:[#allocation5 + $0xd8] sm:$0xff]
        %v397 = vld [vmem:[#allocation5 + $0xe0] sm:$0xff]
        %v398 = vld [vmem:[#allocation5 + $0xe8] sm:$0xff]
        %v399 = vld [vmem:[#allocation5 + $0xf0] sm:$0xff]
        %v400 = vld [vmem:[#allocation5 + $0xf8] sm:$0xff]
        %v401 = vld [vmem:[#allocation5 + $0x100] sm:$0xff]
        %v402 = vld [vmem:[#allocation5 + $0x108] sm:$0xff]
        %v403 = vld [vmem:[#allocation5 + $0x110] sm:$0xff]
        %v404 = vld [vmem:[#allocation5 + $0x118] sm:$0xff]
        %v405 = vld [vmem:[#allocation5 + $0x120] sm:$0xff]
        %v406 = vld [vmem:[#allocation5 + $0x128] sm:$0xff]
        %v407 = vld [vmem:[#allocation5 + $0x130] sm:$0xff]
        %v408 = vld [vmem:[#allocation5 + $0x138] sm:$0xff]
        %v409 = vld [vmem:[#allocation5 + $0x140] sm:$0xff]
        %v410 = vld [vmem:[#allocation5 + $0x148] sm:$0xff]
        %v411 = vld [vmem:[#allocation5 + $0x150] sm:$0xff]
        %v412 = vld [vmem:[#allocation5 + $0x158] sm:$0xff]
        %v413 = vld [vmem:[#allocation5 + $0x160] sm:$0xff]
        %v414 = vld [vmem:[#allocation5 + $0x168] sm:$0xff]
        %v415 = vld [vmem:[#allocation5 + $0x170] sm:$0xff]
        %v416 = vld [vmem:[#allocation5 + $0x178] sm:$0xff]
        %v417 = vld [vmem:[#allocation5 + $0x180] sm:$0xff]
        %v418 = vld [vmem:[#allocation5 + $0x188] sm:$0xff]
        %v419 = vld [vmem:[#allocation5 + $0x190] sm:$0xff]
        %v420 = vld [vmem:[#allocation5 + $0x198] sm:$0xff]
        %v421 = vld [vmem:[#allocation5 + $0x1a0] sm:$0xff]
        %v422 = vld [vmem:[#allocation5 + $0x1a8] sm:$0xff]
        %v423 = vld [vmem:[#allocation5 + $0x1b0] sm:$0xff]
        %v424 = vld [vmem:[#allocation5 + $0x1b8] sm:$0xff]
        %v425 = vld [vmem:[#allocation5 + $0x1c0] sm:$0xff]
        %v426 = vld [vmem:[#allocation5 + $0x1c8] sm:$0xff]
        %v427 = vld [vmem:[#allocation5 + $0x1d0] sm:$0xff]
        %v428 = vld [vmem:[#allocation5 + $0x1d8] sm:$0xff]
        %v429 = vld [vmem:[#allocation5 + $0x1e0] sm:$0xff]
        %v430 = vld [vmem:[#allocation5 + $0x1e8] sm:$0xff]
        %v431 = vld [vmem:[#allocation5 + $0x1f0] sm:$0xff]
        %v432 = vld [vmem:[#allocation5 + $0x1f8] sm:$0xff]
        %v433 = vld [vmem:[#allocation7] sm:$0x3]
        %v435 = vperm.slane %v433, 0
        %v436 = vperm.slane %v433, 1
        %v503 = vunpack.c.l.b16 %v369
        %v504 = vunpack.c.h.b16 %v369
        %v505 = vunpack.c.l.b16 %v370
        %v506 = vunpack.c.h.b16 %v370
        %v507 = vunpack.c.l.b16 %v371
        %v508 = vunpack.c.h.b16 %v371
        %v509 = vunpack.c.l.b16 %v372
        %v510 = vunpack.c.h.b16 %v372
        %v511 = vunpack.c.l.b16 %v373
        %v512 = vunpack.c.h.b16 %v373
        %v513 = vunpack.c.l.b16 %v374
        %v514 = vunpack.c.h.b16 %v374
        %v515 = vunpack.c.l.b16 %v375
        %v516 = vunpack.c.h.b16 %v375
        %v517 = vunpack.c.l.b16 %v376
        %v518 = vunpack.c.h.b16 %v376
        %v519 = vunpack.c.l.b16 %v377
        %v520 = vunpack.c.h.b16 %v377
        %v521 = vunpack.c.l.b16 %v378
        %v522 = vunpack.c.h.b16 %v378
        %v523 = vunpack.c.l.b16 %v379
        %v524 = vunpack.c.h.b16 %v379
        %v525 = vunpack.c.l.b16 %v380
        %v526 = vunpack.c.h.b16 %v380
        %v527 = vunpack.c.l.b16 %v381
        %v528 = vunpack.c.h.b16 %v381
        %v529 = vunpack.c.l.b16 %v382
        %v530 = vunpack.c.h.b16 %v382
        %v531 = vunpack.c.l.b16 %v383
        %v532 = vunpack.c.h.b16 %v383
        %v533 = vunpack.c.l.b16 %v384
        %v534 = vunpack.c.h.b16 %v384
        %v535 = vunpack.c.l.b16 %v385
        %v536 = vunpack.c.h.b16 %v385
        %v537 = vunpack.c.l.b16 %v386
        %v538 = vunpack.c.h.b16 %v386
        %v539 = vunpack.c.l.b16 %v387
        %v540 = vunpack.c.h.b16 %v387
        %v541 = vunpack.c.l.b16 %v388
        %v542 = vunpack.c.h.b16 %v388
        %v543 = vunpack.c.l.b16 %v389
        %v544 = vunpack.c.h.b16 %v389
        %v545 = vunpack.c.l.b16 %v390
        %v546 = vunpack.c.h.b16 %v390
        %v547 = vunpack.c.l.b16 %v391
        %v548 = vunpack.c.h.b16 %v391
        %v549 = vunpack.c.l.b16 %v392
        %v550 = vunpack.c.h.b16 %v392
        %v551 = vunpack.c.l.b16 %v393
        %v552 = vunpack.c.h.b16 %v393
        %v553 = vunpack.c.l.b16 %v394
        %v554 = vunpack.c.h.b16 %v394
        %v555 = vunpack.c.l.b16 %v395
        %v556 = vunpack.c.h.b16 %v395
        %v557 = vunpack.c.l.b16 %v396
        %v558 = vunpack.c.h.b16 %v396
        %v559 = vunpack.c.l.b16 %v397
        %v560 = vunpack.c.h.b16 %v397
        %v561 = vunpack.c.l.b16 %v398
        %v562 = vunpack.c.h.b16 %v398
        %v563 = vunpack.c.l.b16 %v399
        %v564 = vunpack.c.h.b16 %v399
        %v565 = vunpack.c.l.b16 %v400
        %v566 = vunpack.c.h.b16 %v400
        %v567 = vunpack.c.l.b16 %v401
        %v568 = vunpack.c.h.b16 %v401
        %v569 = vunpack.c.l.b16 %v402
        %v570 = vunpack.c.h.b16 %v402
        %v571 = vunpack.c.l.b16 %v403
        %v572 = vunpack.c.h.b16 %v403
        %v573 = vunpack.c.l.b16 %v404
        %v574 = vunpack.c.h.b16 %v404
        %v575 = vunpack.c.l.b16 %v405
        %v576 = vunpack.c.h.b16 %v405
        %v577 = vunpack.c.l.b16 %v406
        %v578 = vunpack.c.h.b16 %v406
        %v579 = vunpack.c.l.b16 %v407
        %v580 = vunpack.c.h.b16 %v407
        %v581 = vunpack.c.l.b16 %v408
        %v582 = vunpack.c.h.b16 %v408
        %v583 = vunpack.c.l.b16 %v409
        %v584 = vunpack.c.h.b16 %v409
        %v585 = vunpack.c.l.b16 %v410
        %v586 = vunpack.c.h.b16 %v410
        %v587 = vunpack.c.l.b16 %v411
        %v588 = vunpack.c.h.b16 %v411
        %v589 = vunpack.c.l.b16 %v412
        %v590 = vunpack.c.h.b16 %v412
        %v591 = vunpack.c.l.b16 %v413
        %v592 = vunpack.c.h.b16 %v413
        %v593 = vunpack.c.l.b16 %v414
        %v594 = vunpack.c.h.b16 %v414
        %v595 = vunpack.c.l.b16 %v415
        %v596 = vunpack.c.h.b16 %v415
        %v597 = vunpack.c.l.b16 %v416
        %v598 = vunpack.c.h.b16 %v416
        %v599 = vunpack.c.l.b16 %v417
        %v600 = vunpack.c.h.b16 %v417
        %v601 = vunpack.c.l.b16 %v418
        %v602 = vunpack.c.h.b16 %v418
        %v603 = vunpack.c.l.b16 %v419
        %v604 = vunpack.c.h.b16 %v419
        %v605 = vunpack.c.l.b16 %v420
        %v606 = vunpack.c.h.b16 %v420
        %v607 = vunpack.c.l.b16 %v421
        %v608 = vunpack.c.h.b16 %v421
        %v609 = vunpack.c.l.b16 %v422
        %v610 = vunpack.c.h.b16 %v422
        %v611 = vunpack.c.l.b16 %v423
        %v612 = vunpack.c.h.b16 %v423
        %v613 = vunpack.c.l.b16 %v424
        %v614 = vunpack.c.h.b16 %v424
        %v615 = vunpack.c.l.b16 %v425
        %v616 = vunpack.c.h.b16 %v425
        %v617 = vunpack.c.l.b16 %v426
        %v618 = vunpack.c.h.b16 %v426
        %v619 = vunpack.c.l.b16 %v427
        %v620 = vunpack.c.h.b16 %v427
        %v621 = vunpack.c.l.b16 %v428
        %v622 = vunpack.c.h.b16 %v428
        %v623 = vunpack.c.l.b16 %v429
        %v624 = vunpack.c.h.b16 %v429
        %v625 = vunpack.c.l.b16 %v430
        %v626 = vunpack.c.h.b16 %v430
        %v627 = vunpack.c.l.b16 %v431
        %v628 = vunpack.c.h.b16 %v431
        %v629 = vunpack.c.l.b16 %v432
        %v630 = vunpack.c.h.b16 %v432
        %v631 = vpack.c.b16 %v505, %v503
        %v632 = vpack.c.b16 %v506, %v504
        %v633 = vpack.c.b16 %v509, %v507
        %v634 = vpack.c.b16 %v510, %v508
        %v635 = vpack.c.b16 %v513, %v511
        %v636 = vpack.c.b16 %v514, %v512
        %v637 = vpack.c.b16 %v517, %v515
        %v638 = vpack.c.b16 %v518, %v516
        %v639 = vpack.c.b16 %v521, %v519
        %v640 = vpack.c.b16 %v522, %v520
        %v641 = vpack.c.b16 %v525, %v523
        %v642 = vpack.c.b16 %v526, %v524
        %v643 = vpack.c.b16 %v529, %v527
        %v644 = vpack.c.b16 %v530, %v528
        %v645 = vpack.c.b16 %v533, %v531
        %v646 = vpack.c.b16 %v534, %v532
        %v647 = vpack.c.b16 %v537, %v535
        %v648 = vpack.c.b16 %v538, %v536
        %v649 = vpack.c.b16 %v541, %v539
        %v650 = vpack.c.b16 %v542, %v540
        %v651 = vpack.c.b16 %v545, %v543
        %v652 = vpack.c.b16 %v546, %v544
        %v653 = vpack.c.b16 %v549, %v547
        %v654 = vpack.c.b16 %v550, %v548
        %v655 = vpack.c.b16 %v553, %v551
        %v656 = vpack.c.b16 %v554, %v552
        %v657 = vpack.c.b16 %v557, %v555
        %v658 = vpack.c.b16 %v558, %v556
        %v659 = vpack.c.b16 %v561, %v559
        %v660 = vpack.c.b16 %v562, %v560
        %v661 = vpack.c.b16 %v565, %v563
        %v662 = vpack.c.b16 %v566, %v564
        %v663 = vpack.c.b16 %v569, %v567
        %v664 = vpack.c.b16 %v570, %v568
        %v665 = vpack.c.b16 %v573, %v571
        %v666 = vpack.c.b16 %v574, %v572
        %v667 = vpack.c.b16 %v577, %v575
        %v668 = vpack.c.b16 %v578, %v576
        %v669 = vpack.c.b16 %v581, %v579
        %v670 = vpack.c.b16 %v582, %v580
        %v671 = vpack.c.b16 %v585, %v583
        %v672 = vpack.c.b16 %v586, %v584
        %v673 = vpack.c.b16 %v589, %v587
        %v674 = vpack.c.b16 %v590, %v588
        %v675 = vpack.c.b16 %v593, %v591
        %v676 = vpack.c.b16 %v594, %v592
        %v677 = vpack.c.b16 %v597, %v595
        %v678 = vpack.c.b16 %v598, %v596
        %v679 = vpack.c.b16 %v601, %v599
        %v680 = vpack.c.b16 %v602, %v600
        %v681 = vpack.c.b16 %v605, %v603
        %v682 = vpack.c.b16 %v606, %v604
        %v683 = vpack.c.b16 %v609, %v607
        %v684 = vpack.c.b16 %v610, %v608
        %v685 = vpack.c.b16 %v613, %v611
        %v686 = vpack.c.b16 %v614, %v612
        %v687 = vpack.c.b16 %v617, %v615
        %v688 = vpack.c.b16 %v618, %v616
        %v689 = vpack.c.b16 %v621, %v619
        %v690 = vpack.c.b16 %v622, %v620
        %v691 = vpack.c.b16 %v625, %v623
        %v692 = vpack.c.b16 %v626, %v624
        %v693 = vpack.c.b16 %v629, %v627
        %v694 = vpack.c.b16 %v630, %v628
        %759 = vmatpush.bf16.msra.mxu0 %v645
        %760 = vmatpush.bf16.msra.mxu0 %v643
        %761 = vmatpush.bf16.msra.mxu0 %v641
        %762 = vmatpush.bf16.msra.mxu0 %v639
        %763 = vmatpush.bf16.msra.mxu0 %v637
        %764 = vmatpush.bf16.msra.mxu0 %v635
        %765 = vmatpush.bf16.msra.mxu0 %v633
        %766 = vmatpush.bf16.msra.mxu0 %v631
        %767 = vmatmul.bf16.gmra.mxu0 %v365
        %v768 = vpop.f32.mrf.mxu0
        %v769 = vadd.f32 %v435, %v768
        %v770 = vpop.f32.mrf.mxu0
        %771 = vdwg.mxu0
        %772 = vmatpush.bf16.msra.mxu0 %v661
        %773 = vmatpush.bf16.msra.mxu0 %v659
        %774 = vmatpush.bf16.msra.mxu0 %v657
        %775 = vmatpush.bf16.msra.mxu0 %v655
        %776 = vmatpush.bf16.msra.mxu0 %v653
        %777 = vmatpush.bf16.msra.mxu0 %v651
        %778 = vmatpush.bf16.msra.mxu0 %v649
        %779 = vmatpush.bf16.msra.mxu0 %v647
        %780 = vmatmul.bf16.gmra.mxu0 %v366
        %v781 = vpop.f32.mrf.mxu0
        %v782 = vadd.f32 %v769, %v781
        %v783 = vpop.f32.mrf.mxu0
        %784 = vdwg.mxu0
        %785 = vmatpush.bf16.msra.mxu0 %v677
        %786 = vmatpush.bf16.msra.mxu0 %v675
        %787 = vmatpush.bf16.msra.mxu0 %v673
        %788 = vmatpush.bf16.msra.mxu0 %v671
        %789 = vmatpush.bf16.msra.mxu0 %v669
        %790 = vmatpush.bf16.msra.mxu0 %v667
        %791 = vmatpush.bf16.msra.mxu0 %v665
        %792 = vmatpush.bf16.msra.mxu0 %v663
        %793 = vmatmul.bf16.gmra.mxu0 %v367
        %v794 = vpop.f32.mrf.mxu0
        %v795 = vadd.f32 %v782, %v794
        %v796 = vpop.f32.mrf.mxu0
        %797 = vdwg.mxu0
        %798 = vmatpush.bf16.msra.mxu0 %v693
        %799 = vmatpush.bf16.msra.mxu0 %v691
        %800 = vmatpush.bf16.msra.mxu0 %v689
        %801 = vmatpush.bf16.msra.mxu0 %v687
        %802 = vmatpush.bf16.msra.mxu0 %v685
        %803 = vmatpush.bf16.msra.mxu0 %v683
        %804 = vmatpush.bf16.msra.mxu0 %v681
        %805 = vmatpush.bf16.msra.mxu0 %v679
        %806 = vmatmul.bf16.gmra.mxu0 %v368
        %v807 = vpop.f32.mrf.mxu0
        %v808 = vadd.f32 %v795, %v807
        %v809 = vpop.f32.mrf.mxu0
        %810 = vdwg.mxu0
        %811 = vmatpush.bf16.msra.mxu0 %v646
        %812 = vmatpush.bf16.msra.mxu0 %v644
        %813 = vmatpush.bf16.msra.mxu0 %v642
        %814 = vmatpush.bf16.msra.mxu0 %v640
        %815 = vmatpush.bf16.msra.mxu0 %v638
        %816 = vmatpush.bf16.msra.mxu0 %v636
        %817 = vmatpush.bf16.msra.mxu0 %v634
        %818 = vmatpush.bf16.msra.mxu0 %v632
        %819 = vmatmul.bf16.gmra.mxu0 %v365
        %v820 = vpop.f32.mrf.mxu0
        %v821 = vadd.f32 %v436, %v820
        %v822 = vpop.f32.mrf.mxu0
        %823 = vdwg.mxu0
        %824 = vmatpush.bf16.msra.mxu0 %v662
        %825 = vmatpush.bf16.msra.mxu0 %v660
        %826 = vmatpush.bf16.msra.mxu0 %v658
        %827 = vmatpush.bf16.msra.mxu0 %v656
        %828 = vmatpush.bf16.msra.mxu0 %v654
        %829 = vmatpush.bf16.msra.mxu0 %v652
        %830 = vmatpush.bf16.msra.mxu0 %v650
        %831 = vmatpush.bf16.msra.mxu0 %v648
        %832 = vmatmul.bf16.gmra.mxu0 %v366
        %v833 = vpop.f32.mrf.mxu0
        %v834 = vadd.f32 %v821, %v833
        %v835 = vpop.f32.mrf.mxu0
        %836 = vdwg.mxu0
        %837 = vmatpush.bf16.msra.mxu0 %v678
        %838 = vmatpush.bf16.msra.mxu0 %v676
        %839 = vmatpush.bf16.msra.mxu0 %v674
        %840 = vmatpush.bf16.msra.mxu0 %v672
        %841 = vmatpush.bf16.msra.mxu0 %v670
        %842 = vmatpush.bf16.msra.mxu0 %v668
        %843 = vmatpush.bf16.msra.mxu0 %v666
        %844 = vmatpush.bf16.msra.mxu0 %v664
        %845 = vmatmul.bf16.gmra.mxu0 %v367
        %v846 = vpop.f32.mrf.mxu0
        %v847 = vadd.f32 %v834, %v846
        %v848 = vpop.f32.mrf.mxu0
        %849 = vdwg.mxu0
        %850 = vmatpush.bf16.msra.mxu0 %v694
        %851 = vmatpush.bf16.msra.mxu0 %v692
        %852 = vmatpush.bf16.msra.mxu0 %v690
        %853 = vmatpush.bf16.msra.mxu0 %v688
        %854 = vmatpush.bf16.msra.mxu0 %v686
        %855 = vmatpush.bf16.msra.mxu0 %v684
        %856 = vmatpush.bf16.msra.mxu0 %v682
        %857 = vmatpush.bf16.msra.mxu0 %v680
        %858 = vmatmul.bf16.gmra.mxu0 %v368
        %v859 = vpop.f32.mrf.mxu0
        %v860 = vadd.f32 %v847, %v859
        %v861 = vpop.f32.mrf.mxu0
        %862 = vdwg.mxu0
        %v863 = vmax.f32 %v808, 0.0
        %v864 = vmax.f32 %v860, 0.0
        %v865 = vpack.c.bf16 %v863, %v863
        %v866 = vpack.c.bf16 %v864, %v864
        %v867 = vld [vmem:[#allocation8] sm:$0xf]
        %v868 = vld [vmem:[#allocation8 + $0x4] sm:$0xf]
        %v869 = vld [vmem:[#allocation8 + $0x8] sm:$0xf]
        %v870 = vld [vmem:[#allocation8 + $0xc] sm:$0xf]
        %v871 = vld [vmem:[#allocation8 + $0x10] sm:$0xf]
        %v872 = vld [vmem:[#allocation8 + $0x14] sm:$0xf]
        %v873 = vld [vmem:[#allocation8 + $0x18] sm:$0xf]
        %v874 = vld [vmem:[#allocation8 + $0x1c] sm:$0xf]
        %v875 = vld [vmem:[#allocation8 + $0x20] sm:$0xf]
        %v876 = vld [vmem:[#allocation8 + $0x24] sm:$0xf]
        %v877 = vld [vmem:[#allocation8 + $0x28] sm:$0xf]
        %v878 = vld [vmem:[#allocation8 + $0x2c] sm:$0xf]
        %v879 = vld [vmem:[#allocation8 + $0x30] sm:$0xf]
        %v880 = vld [vmem:[#allocation8 + $0x34] sm:$0xf]
        %v881 = vld [vmem:[#allocation8 + $0x38] sm:$0xf]
        %v882 = vld [vmem:[#allocation8 + $0x3c] sm:$0xf]
        %v883 = vld [vmem:[#allocation8 + $0x40] sm:$0xf]
        %v884 = vld [vmem:[#allocation8 + $0x44] sm:$0xf]
        %v885 = vld [vmem:[#allocation8 + $0x48] sm:$0xf]
        %v886 = vld [vmem:[#allocation8 + $0x4c] sm:$0xf]
        %v887 = vld [vmem:[#allocation8 + $0x50] sm:$0xf]
        %v888 = vld [vmem:[#allocation8 + $0x54] sm:$0xf]
        %v889 = vld [vmem:[#allocation8 + $0x58] sm:$0xf]
        %v890 = vld [vmem:[#allocation8 + $0x5c] sm:$0xf]
        %v891 = vld [vmem:[#allocation8 + $0x60] sm:$0xf]
        %v892 = vld [vmem:[#allocation8 + $0x64] sm:$0xf]
        %v893 = vld [vmem:[#allocation8 + $0x68] sm:$0xf]
        %v894 = vld [vmem:[#allocation8 + $0x6c] sm:$0xf]
        %v895 = vld [vmem:[#allocation8 + $0x70] sm:$0xf]
        %v896 = vld [vmem:[#allocation8 + $0x74] sm:$0xf]
        %v897 = vld [vmem:[#allocation8 + $0x78] sm:$0xf]
        %v898 = vld [vmem:[#allocation8 + $0x7c] sm:$0xf]
        %v899 = vld [vmem:[%s4] sm:$0x1]
        %v901 = vperm.slane %v899, 0
        %v935 = vunpack.c.l.b16 %v867
        %v936 = vunpack.c.l.b16 %v868
        %v937 = vunpack.c.l.b16 %v869
        %v938 = vunpack.c.l.b16 %v870
        %v939 = vunpack.c.l.b16 %v871
        %v940 = vunpack.c.l.b16 %v872
        %v941 = vunpack.c.l.b16 %v873
        %v942 = vunpack.c.l.b16 %v874
        %v943 = vunpack.c.l.b16 %v875
        %v944 = vunpack.c.l.b16 %v876
        %v945 = vunpack.c.l.b16 %v877
        %v946 = vunpack.c.l.b16 %v878
        %v947 = vunpack.c.l.b16 %v879
        %v948 = vunpack.c.l.b16 %v880
        %v949 = vunpack.c.l.b16 %v881
        %v950 = vunpack.c.l.b16 %v882
        %v951 = vunpack.c.l.b16 %v883
        %v952 = vunpack.c.l.b16 %v884
        %v953 = vunpack.c.l.b16 %v885
        %v954 = vunpack.c.l.b16 %v886
        %v955 = vunpack.c.l.b16 %v887
        %v956 = vunpack.c.l.b16 %v888
        %v957 = vunpack.c.l.b16 %v889
        %v958 = vunpack.c.l.b16 %v890
        %v959 = vunpack.c.l.b16 %v891
        %v960 = vunpack.c.l.b16 %v892
        %v961 = vunpack.c.l.b16 %v893
        %v962 = vunpack.c.l.b16 %v894
        %v963 = vunpack.c.l.b16 %v895
        %v964 = vunpack.c.l.b16 %v896
        %v965 = vunpack.c.l.b16 %v897
        %v966 = vunpack.c.l.b16 %v898
        %v967 = vpack.c.b16 %v936, %v935
        %v968 = vpack.c.b16 %v938, %v937
        %v969 = vpack.c.b16 %v940, %v939
        %v970 = vpack.c.b16 %v942, %v941
        %v971 = vpack.c.b16 %v944, %v943
        %v972 = vpack.c.b16 %v946, %v945
        %v973 = vpack.c.b16 %v948, %v947
        %v974 = vpack.c.b16 %v950, %v949
        %v975 = vpack.c.b16 %v952, %v951
        %v976 = vpack.c.b16 %v954, %v953
        %v977 = vpack.c.b16 %v956, %v955
        %v978 = vpack.c.b16 %v958, %v957
        %v979 = vpack.c.b16 %v960, %v959
        %v980 = vpack.c.b16 %v962, %v961
        %v981 = vpack.c.b16 %v964, %v963
        %v982 = vpack.c.b16 %v966, %v965
        %999 = vmatpush.bf16.msra.mxu0 %v974
        %1000 = vmatpush.bf16.msra.mxu0 %v973
        %1001 = vmatpush.bf16.msra.mxu0 %v972
        %1002 = vmatpush.bf16.msra.mxu0 %v971
        %1003 = vmatpush.bf16.msra.mxu0 %v970
        %1004 = vmatpush.bf16.msra.mxu0 %v969
        %1005 = vmatpush.bf16.msra.mxu0 %v968
        %1006 = vmatpush.bf16.msra.mxu0 %v967
        %1007 = vmatmul.bf16.gmra.mxu0 %v865
        %v1008 = vpop.f32.mrf.mxu0
        %v1009 = vadd.f32 %v901, %v1008
        %v1010 = vpop.f32.mrf.mxu0
        %1011 = vdwg.mxu0
        %1012 = vmatpush.bf16.msra.mxu0 %v982
        %1013 = vmatpush.bf16.msra.mxu0 %v981
        %1014 = vmatpush.bf16.msra.mxu0 %v980
        %1015 = vmatpush.bf16.msra.mxu0 %v979
        %1016 = vmatpush.bf16.msra.mxu0 %v978
        %1017 = vmatpush.bf16.msra.mxu0 %v977
        %1018 = vmatpush.bf16.msra.mxu0 %v976
        %1019 = vmatpush.bf16.msra.mxu0 %v975
        %1020 = vmatmul.bf16.gmra.mxu0 %v866
        %v1021 = vpop.f32.mrf.mxu0
        %v1022 = vadd.f32 %v1009, %v1021
        %v1023 = vpop.f32.mrf.mxu0
        %1024 = vdwg.mxu0
        %v1025 = vmax.f32 %v1022, 0.0
        %v1026 = vpack.c.bf16 %v1025, %v1025
        %v1027 = vld [vmem:[#allocation10] sm:$0xf]
        %v1028 = vld [vmem:[#allocation10 + $0x4] sm:$0xf]
        %v1029 = vld [vmem:[#allocation10 + $0x8] sm:$0xf]
        %v1030 = vld [vmem:[#allocation10 + $0xc] sm:$0xf]
        %v1031 = vld [vmem:[#allocation10 + $0x10] sm:$0xf]
        %v1032 = vld [vmem:[#allocation10 + $0x14] sm:$0xf]
        %v1033 = vld [vmem:[#allocation10 + $0x18] sm:$0xf]
        %v1034 = vld [vmem:[#allocation10 + $0x1c] sm:$0xf]
        %v1035 = vld [vmem:[#allocation10 + $0x20] sm:$0xf]
        %v1036 = vld [vmem:[#allocation10 + $0x24] sm:$0xf]
        %v1037 = vld [vmem:[#allocation10 + $0x28] sm:$0xf]
        %v1038 = vld [vmem:[#allocation10 + $0x2c] sm:$0xf]
        %v1039 = vld [vmem:[#allocation10 + $0x30] sm:$0xf]
        %v1040 = vld [vmem:[#allocation10 + $0x34] sm:$0xf]
        %v1041 = vld [vmem:[#allocation10 + $0x38] sm:$0xf]
        %v1042 = vld [vmem:[#allocation10 + $0x3c] sm:$0xf]
        %v1043 = vld [vmem:[%s6] sm:$0x1]
        %v1045 = vperm.slane %v1043, 0
        %v1063 = vunpack.c.l.b16 %v1027
        %v1064 = vunpack.c.l.b16 %v1028
        %v1065 = vunpack.c.l.b16 %v1029
        %v1066 = vunpack.c.l.b16 %v1030
        %v1067 = vunpack.c.l.b16 %v1031
        %v1068 = vunpack.c.l.b16 %v1032
        %v1069 = vunpack.c.l.b16 %v1033
        %v1070 = vunpack.c.l.b16 %v1034
        %v1071 = vunpack.c.l.b16 %v1035
        %v1072 = vunpack.c.l.b16 %v1036
        %v1073 = vunpack.c.l.b16 %v1037
        %v1074 = vunpack.c.l.b16 %v1038
        %v1075 = vunpack.c.l.b16 %v1039
        %v1076 = vunpack.c.l.b16 %v1040
        %v1077 = vunpack.c.l.b16 %v1041
        %v1078 = vunpack.c.l.b16 %v1042
        %v1079 = vpack.c.b16 %v1064, %v1063
        %v1080 = vpack.c.b16 %v1066, %v1065
        %v1081 = vpack.c.b16 %v1068, %v1067
        %v1082 = vpack.c.b16 %v1070, %v1069
        %v1083 = vpack.c.b16 %v1072, %v1071
        %v1084 = vpack.c.b16 %v1074, %v1073
        %v1085 = vpack.c.b16 %v1076, %v1075
        %v1086 = vpack.c.b16 %v1078, %v1077
        %1095 = vmatpush.bf16.msra.mxu0 %v1086
        %1096 = vmatpush.bf16.msra.mxu0 %v1085
        %1097 = vmatpush.bf16.msra.mxu0 %v1084
        %1098 = vmatpush.bf16.msra.mxu0 %v1083
        %1099 = vmatpush.bf16.msra.mxu0 %v1082
        %1100 = vmatpush.bf16.msra.mxu0 %v1081
        %1101 = vmatpush.bf16.msra.mxu0 %v1080
        %1102 = vmatpush.bf16.msra.mxu0 %v1079
        %1103 = vmatmul.bf16.gmra.mxu0 %v1026
        %v1104 = vpop.f32.mrf.mxu0
        %v1105 = vadd.f32 %v1045, %v1104
        %v1106 = vpop.f32.mrf.mxu0
        %1107 = vdwg.mxu0
        %v1108 = vpack.c.bf16 %v1105, %v1105
        %1109 = vst [vmem:[%s360] sm:$0xf] %v1108
        %s1110 = sand.u32 %s186, 1
        %s1111 = scalar_lea.sflag [#allocation4], %s1110
        %s1112 = sand.u32 %s186, 1
        %s1113 = smul.addr %s1112, 4
        %s1114 = scalar_lea.vmem [#allocation11], %s1113
        // Predicated region
        $region69: #{tpu_custom_call.1} parent=47 // pred_check
          %p1115 = pneg %p196
        $region70: #{tpu_custom_call.1} parent=47 // pred_check_branch
          %1117 = sbr.rel (%p1115) target = $region72
        $region71: #{tpu_custom_call.1} parent=47 // pred_region
          %1119 = vsyncadd %s1111, 0
          %s1120 = smul.addr %s26, 4
          %s1121 = scalar_lea.hbm %s7, %s1120
          %s1123 = sshll.u32 %s1114, 4
          %s1124 = int_to_ptr.vmem [resolvable:$true] %s1123
          %s1125 = sshll.u32 %s1121, 4
          %s1126 = int_to_ptr.hbm [resolvable:$true] %s1125
          %1128 = dma.vmem_to_hbm [thread:$0]  %s1124, 64, %s1126, %s1111
        $region72: #{tpu_custom_call.1} parent=47 // pred_fallthru
          _
      $region48: #{tpu_custom_call.1} parent=5 // pred_fallthru
        _
      %p1129 = scmp.le.s32.totalorder 2, %s21
      // Predicated region
      $region73: #{tpu_custom_call.1} parent=5 // pred_check
        %p1130 = pneg %p1129
      $region74: #{tpu_custom_call.1} parent=5 // pred_check_branch
        %1132 = sbr.rel (%p1130) target = $region76
      $region75: #{tpu_custom_call.1} parent=5 // pred_region
        %s1133 = ssub.s32 %s21, 2
        // Predicated region
        $region77: #{tpu_custom_call.1} parent=75 // pred_check
          %p1134 = pneg %p202
        $region78: #{tpu_custom_call.1} parent=75 // pred_check_branch
          %1136 = sbr.rel (%p1134) target = $region80
        $region79: #{tpu_custom_call.1} parent=75 // pred_region
          %s1137 = sand.u32 %s187, 1
          %s1138 = scalar_lea.sflag [#allocation4], %s1137
          %s1139 = sand.u32 %s187, 1
          %s1140 = smul.addr %s1139, 4
          %s1141 = scalar_lea.vmem [#allocation11], %s1140
          %1143 = dma.done %s1138, 64
        $region80: #{tpu_custom_call.1} parent=75 // pred_fallthru
          _
      $region76: #{tpu_custom_call.1} parent=5 // pred_fallthru
        _
    $region6: #{tpu_custom_call.1} parent=1 // loop_footer
      %s25 = sadd.s32 1, %s21
    $region7: #{tpu_custom_call.1} parent=1 // loop_footer_branch
      %20 = sbr.rel target = $region3
    $region8: #{tpu_custom_call.1} parent=1 // loop_exit
      _
    %1144 = vsyncpa [#allocation3], 1
    %s1145 = scalar_lea.sflag [#allocation3], 1
    %1146 = vsyncpa %s1145, 1
    %1147 = vsyncpa [#allocation6], 1
    %1148 = vsyncpa [#allocation9], 1
    %1149 = vsyncpa [#allocation4], 1
    %s1150 = scalar_lea.sflag [#allocation4], 1
    %1151 = vsyncpa %s1150, 1

</llo_original>
